<compile_context>
chip_gen: v7x
topology: tpu7x:2x2x1
jax: 0.10.0
libtpu: 0.0.40
codegen_flags: <defaults>
</compile_context>

<pallas_src>
import jax
import jax.numpy as jnp
from jax import lax
from jax.experimental import pallas as pl
from jax.experimental.pallas import tpu as pltpu


# -----------------------------------------------------------------------------
# Kernel 1: per-channel image normalization  (preprocess_image)
# -----------------------------------------------------------------------------
def _normalize_kernel(scale_ref, bias_ref, img_ref, out_ref):
    # scale_ref / bias_ref: f32[C] in SMEM (scale = 1/std, bias = -mean/std).
    # img_ref / out_ref: (1, 1, TH, W) row-stripe in VMEM.
    c = pl.program_id(1)
    scale = scale_ref[c]
    bias = bias_ref[c]
    out_ref[...] = (img_ref[...] * scale + bias).astype(out_ref.dtype)


def _choose_row_tile(H, W, in_bytes, out_bytes, budget_bytes=16 << 20):
    """Pick a sublane (row) tile that keeps double-buffered in+out within a
    conservative VMEM budget (safe for v7x's 64 MiB physical / 32 MiB default
    scoped VMEM as well as v5e/v6e).  TH is a multiple of 8 or the full H."""
    per_row = W * (in_bytes + out_bytes) * 2  # x2 for double buffering
    th = budget_bytes // max(per_row, 1)
    th = min(th, H, 1024)
    th = max(8, (th // 8) * 8)
    if th >= H:
        return H  # full plane; equals the array dim so no (8,) constraint
    return th


def preprocess_image(images, pixel_mean, pixel_std, out_dtype=jnp.float32):
    """images: f32[B, C, H, W] (NCHW).  Returns out_dtype[B, C, H, W].

    Implements `(x - pixel_mean) / pixel_std` as `x * scale + bias` with
    scale = 1/std, bias = -mean/std precomputed once in the wrapper.
    """
    B, C, H, W = images.shape
    scale = (1.0 / pixel_std).astype(jnp.float32)
    bias = (-pixel_mean / pixel_std).astype(jnp.float32)

    in_bytes = jnp.dtype(images.dtype).itemsize
    out_bytes = jnp.dtype(out_dtype).itemsize
    TH = _choose_row_tile(H, W, in_bytes, out_bytes)
    n_h = pl.cdiv(H, TH)

    return pl.pallas_call(
        _normalize_kernel,
        out_shape=jax.ShapeDtypeStruct((B, C, H, W), out_dtype),
        grid_spec=pltpu.PrefetchScalarGridSpec(
            num_scalar_prefetch=0,
            grid=(B, C, n_h),
            in_specs=[
                pl.BlockSpec(memory_space=pltpu.MemorySpace.SMEM),  # scale
                pl.BlockSpec(memory_space=pltpu.MemorySpace.SMEM),  # bias
                pl.BlockSpec((1, 1, TH, W), lambda b, c, h: (b, c, h, 0)),
            ],
            out_specs=pl.BlockSpec((1, 1, TH, W), lambda b, c, h: (b, c, h, 0)),
        ),
        compiler_params=pltpu.CompilerParams(
            dimension_semantics=("parallel", "parallel", "parallel")),
        # NOTE: input_output_aliases={2: 0} could be added when the raw image
        # is not needed afterwards (saves an HBM allocation); left off so the
        # caller keeps ownership of the un-normalized image.
    )(scale, bias, images)


# -----------------------------------------------------------------------------
# Kernel 2: cell-proposal generation from nuclei boxes
#   (scale_boxes_relative_to_center(., 2, 2) + Boxes.clip(image_size))
# -----------------------------------------------------------------------------
def _make_cell_proposal_kernel(scale_x, scale_y, img_h, img_w):
    half_sx = 0.5 * (scale_x - 1.0)   # width_diffs / 2  per unit width
    half_sy = 0.5 * (scale_y - 1.0)   # height_diffs / 2 per unit height

    def kernel(boxes_ref, out_boxes_ref):
        # boxes_ref: f32[B, 4, Np] with rows (x0, y0, x1, y1); single load.
        b = boxes_ref[...]
        x0 = b[:, 0:1, :]
        y0 = b[:, 1:2, :]
        x1 = b[:, 2:3, :]
        y1 = b[:, 3:4, :]
        dw = half_sx * (x1 - x0)     # [B, 1, Np]
        dh = half_sy * (y1 - y0)     # [B, 1, Np]
        # Vectorized per-row select over the sublane (coordinate) axis:
        #   rows 0/2 -> x coords (delta dw, bound W), rows 1/3 -> y coords,
        #   rows 0/1 shrink (-delta), rows 2/3 grow (+delta).
        row = lax.broadcasted_iota(jnp.int32, b.shape, 1)
        is_x = (row % 2) == 0
        delta = jnp.where(is_x, dw, dh)                 # broadcast over rows
        sign = jnp.where(row < 2, -1.0, 1.0)
        bound = jnp.where(is_x, img_w, img_h)
        # expand about center, then Boxes.clip(image_size); one full-tile store
        out_boxes_ref[...] = jnp.clip(b + sign * delta, 0.0, bound)

    return kernel


def generate_cell_proposals(nuclei_pred_boxes, image_size,
                            scale_x=2.0, scale_y=2.0):
    """nuclei_pred_boxes: f32[B, 4, N] (rows x0, y0, x1, y1).
    Returns (cell_proposal_boxes f32[B, 4, N], objectness_logits f32[B, N])."""
    B, four, N = nuclei_pred_boxes.shape
    assert four == 4
    img_h, img_w = image_size

    # Pad N to a multiple of 128 so the kernel's lane-dim stores are unmasked.
    n_pad = ((N + 127) // 128) * 128
    boxes_in = nuclei_pred_boxes
    if n_pad != N:
        boxes_in = jnp.pad(nuclei_pred_boxes, ((0, 0), (0, 0), (0, n_pad - N)))

    kernel = _make_cell_proposal_kernel(float(scale_x), float(scale_y),
                                        float(img_h), float(img_w))
    # Whole working set is tiny: single grid step, full-array VMEM blocks.
    boxes = pl.pallas_call(
        kernel,
        out_shape=jax.ShapeDtypeStruct((B, 4, n_pad), jnp.float32),
        in_specs=[pl.BlockSpec(memory_space=pltpu.MemorySpace.VMEM)],
        out_specs=pl.BlockSpec(memory_space=pltpu.MemorySpace.VMEM),
    )(boxes_in)
    boxes = boxes[:, :, :N]

    # calculate_objectness_for_cell_proposals: constant zeros -> plain JAX,
    # no kernel output / DMA writeback needed.
    objectness = jnp.zeros((B, N), jnp.float32)
    return boxes, objectness


if __name__ == "__main__":
    key = jax.random.PRNGKey(0)
    k1, k2, k3 = jax.random.split(key, 3)

    # Non-square spatial dims so an H/W swap in the clip bounds would be caught.
    B, C, H, W = 2, 3, 24, 16   # small NCHW image batch
    N = 8                       # synthetic nuclei predictions per image

    images = jax.random.uniform(k1, (B, C, H, W), jnp.float32, 0.0, 255.0)
    # Deterministic "registered buffers" (same role as pixel_mean / pixel_std)
    pixel_mean = jnp.array([103.530, 116.280, 123.675], jnp.float32)
    pixel_std = jnp.array([57.375, 57.120, 58.395], jnp.float32)

    # Synthetic nuclei predicted boxes (x0, y0, x1, y1) inside the image.
    cx = jax.random.uniform(k2, (B, N), jnp.float32, 2.0, 14.0)   # x in [0, W=16]
    cy = jax.random.uniform(k3, (B, N), jnp.float32, 2.0, 22.0)   # y in [0, H=24]
    sizes = jax.random.uniform(jax.random.PRNGKey(7), (B, 2, N), jnp.float32, 1.0, 5.0)
    x0 = cx - sizes[:, 0] / 2
    x1 = cx + sizes[:, 0] / 2
    y0 = cy - sizes[:, 1] / 2
    y1 = cy + sizes[:, 1] / 2
    nuclei_boxes = jnp.stack([x0, y0, x1, y1], axis=1)   # [B, 4, N]

    normed = preprocess_image(images, pixel_mean, pixel_std)
    normed_bf16 = preprocess_image(images, pixel_mean, pixel_std,
                                   out_dtype=jnp.bfloat16)
    cell_boxes, objectness = generate_cell_proposals(nuclei_boxes, (H, W))
    jax.block_until_ready((normed, normed_bf16, cell_boxes, objectness))

    # Reference checks (pure JAX).
    ref_norm = (images - pixel_mean[None, :, None, None]) / pixel_std[None, :, None, None]
    assert jnp.allclose(normed, ref_norm, atol=1e-5)
    assert jnp.allclose(normed_bf16.astype(jnp.float32), ref_norm, atol=5e-2)

    w_ref = nuclei_boxes[:, 2] - nuclei_boxes[:, 0]
    h_ref = nuclei_boxes[:, 3] - nuclei_boxes[:, 1]
    rx0 = jnp.clip(nuclei_boxes[:, 0] - w_ref / 2, 0.0, W)
    ry0 = jnp.clip(nuclei_boxes[:, 1] - h_ref / 2, 0.0, H)
    rx1 = jnp.clip(nuclei_boxes[:, 2] + w_ref / 2, 0.0, W)
    ry1 = jnp.clip(nuclei_boxes[:, 3] + h_ref / 2, 0.0, H)
    ref_boxes = jnp.stack([rx0, ry0, rx1, ry1], axis=1)
    assert jnp.allclose(cell_boxes, ref_boxes, atol=1e-5)
    assert jnp.allclose(objectness, jnp.zeros((B, N)))

    print("KERNEL_OK")
</pallas_src>

<mosaic_0001>
module attributes {stable_mosaic.version = 11 : i64} {
  func.func @_normalize_kernel(%arg0: i32, %arg1: i32, %arg2: i32, %arg3: memref<3xf32, #tpu.memory_space<smem>>, %arg4: memref<3xf32, #tpu.memory_space<smem>>, %arg5: memref<1x1x24x16xf32, #tpu.memory_space<vmem>>, %arg6: memref<1x1x24x16xf32, #tpu.memory_space<vmem>>) attributes {dimension_semantics = [#tpu.dimension_semantics<parallel>, #tpu.dimension_semantics<parallel>, #tpu.dimension_semantics<parallel>], iteration_bounds = array<i64: 2, 3, 1>, scalar_prefetch = 0 : i64, scratch_operands = 0 : i64, tpu.core_type = #tpu.core_type<tc>, window_params = [{transform_indices = @transform_0, window_bounds = array<i64: 3>}, {transform_indices = @transform_1, window_bounds = array<i64: 3>}, {transform_indices = @transform_2, window_bounds = array<i64: 1, 1, 24, 16>}, {transform_indices = @transform_3, window_bounds = array<i64: 1, 1, 24, 16>}]} {
    %0 = arith.index_cast %arg1 : i32 to index
    %1 = memref.load %arg3[%0] : memref<3xf32, #tpu.memory_space<smem>>
    %2 = arith.index_cast %arg1 : i32 to index
    %3 = memref.load %arg4[%2] : memref<3xf32, #tpu.memory_space<smem>>
    %c0 = arith.constant 0 : index
    %c0_0 = arith.constant 0 : index
    %c0_1 = arith.constant 0 : index
    %c0_2 = arith.constant 0 : index
    %4 = vector.load %arg5[%c0, %c0_0, %c0_1, %c0_2] : memref<1x1x24x16xf32, #tpu.memory_space<vmem>>, vector<1x1x24x16xf32>
    %5 = vector.broadcast %1 : f32 to vector<1x1x24x16xf32>
    %6 = arith.mulf %4, %5 : vector<1x1x24x16xf32>
    %7 = vector.broadcast %3 : f32 to vector<1x1x24x16xf32>
    %8 = arith.addf %6, %7 : vector<1x1x24x16xf32>
    %c0_3 = arith.constant 0 : index
    %c0_4 = arith.constant 0 : index
    %c0_5 = arith.constant 0 : index
    %c0_6 = arith.constant 0 : index
    %9 = vector.load %arg6[%c0_3, %c0_4, %c0_5, %c0_6] : memref<1x1x24x16xf32, #tpu.memory_space<vmem>>, vector<1x1x24x16xf32>
    tpu.vector_store %arg6[%c0_3, %c0_4, %c0_5, %c0_6], %8 {strides = array<i32>} : memref<1x1x24x16xf32, #tpu.memory_space<vmem>>, vector<1x1x24x16xf32>,
    return
  }
  func.func @transform_0(%arg0: i32, %arg1: i32, %arg2: i32) -> i32 {
    %c0_i32 = arith.constant 0 : i32
    %c0_i32_0 = arith.constant 0 : i32
    return %c0_i32 : i32
  }
  func.func @transform_1(%arg0: i32, %arg1: i32, %arg2: i32) -> i32 {
    %c0_i32 = arith.constant 0 : i32
    %c0_i32_0 = arith.constant 0 : i32
    return %c0_i32 : i32
  }
  func.func @transform_2(%arg0: i32, %arg1: i32, %arg2: i32) -> (i32, i32, i32, i32) {
    %c0_i32 = arith.constant 0 : i32
    %c0_i32_0 = arith.constant 0 : i32
    return %arg0, %arg1, %arg2, %c0_i32 : i32, i32, i32, i32
  }
  func.func @transform_3(%arg0: i32, %arg1: i32, %arg2: i32) -> (i32, i32, i32, i32) {
    %c0_i32 = arith.constant 0 : i32
    %c0_i32_0 = arith.constant 0 : i32
    return %arg0, %arg1, %arg2, %c0_i32 : i32, i32, i32, i32
  }
}

</mosaic_0001>

<llo_original>
// kernel: tpu_custom_call.1
$region0: #{tpu_custom_call.1}
  #allocation0 [shape = 'u32[]', space=smem, size = 0x4, offset = 0x4, fixed_abs, tag = 'smem constant byte address 0x4 - core index']
  #allocation1 [shape = 'u32[144,128]{1,0:T(1,128)}', space=vmem, size = 0x12000, scoped, tag = 'internal scratch']
  %s0 = inlined_call_operand.vmem [shape: f32[3], index: 0, kind: input, shape index: {}]
  %s1 = inlined_call_operand.vmem [shape: f32[3], index: 1, kind: input, shape index: {}]
  %s2 = inlined_call_operand.vmem [shape: f32[2,3,24,16], index: 2, kind: input, shape index: {}]
  %s3 = inlined_call_operand.vmem [shape: f32[2,3,24,16], index: 3, kind: output, shape index: {}]
  %s4 = sld [smem:[#allocation0]]
  $region53: #{tpu_custom_call.1} parent=0
    _
  %s6 = ssub.s32 1, %s4
  %s7 = scalar_select 0, %s6, %s4
  $region1: #{tpu_custom_call.1} parent=0
    #allocation2 [shape = 'u8[512]{0}', space=smem, size = 0x200, scoped, tag = 'input window, operand 0, single buffered']
    #allocation3 [shape = 's32[2]{0}', space=sflag, size = 0x8, scoped, tag = 'scoped memory for tpu_custom_call.1']
    #allocation4 [shape = 'u8[512]{0}', space=smem, size = 0x200, scoped, tag = 'input window, operand 1, single buffered']
    #allocation5 [shape = 's32[1]{0}', space=sflag, size = 0x4, scoped, tag = 'scoped memory for tpu_custom_call.1']
    %8 = vsyncpa [#allocation3], 0
    %9 = vsyncpa [#allocation5], 0
    loop: start=0, step=1, limit=8
    $region2: #{tpu_custom_call.1} parent=1 // loop_pre_header
      _
    $region3: #{tpu_custom_call.1} parent=1 // loop_header
      %s11 = sphi 0, %s15
      %p12 = scmp.ge.s32.totalorder %s11, 8
      %s18 = sphi 0, %s37
      %s19 = sphi 0, %s33
      %s20 = sphi 0, %s29
      %s21 = sphi 0, %s18
      %s22 = sphi 0, %s19
      %s23 = sphi 0, %s20
      %s24 = sphi 0, %s21
      %s25 = sphi 0, %s22
      %s26 = sphi 0, %s23
      %s38 = sphi 0, %s38
      %s40 = sphi 0, %s38
      %s41 = sphi 0, %s40
      %s55 = sphi 0, %s41
      %s59 = sphi 0, %s59
      %s61 = sphi 0, %s59
      %s62 = sphi 0, %s61
      %s76 = sphi 0, %s62
      %s86 = sphi 0, %s88
      %s89 = sphi 0, %s86
      %s90 = sphi 0, %s89
      %s106 = sphi 0, %s90
      %s116 = sphi 0, %s118
      %s119 = sphi 0, %s116
      %s120 = sphi 0, %s119
      %s136 = sphi 0, %s120
    $region4: #{tpu_custom_call.1} parent=1 // loop_header_branch
      %14 = sbr.rel (%p12) target = $region8
    $region5: #{tpu_custom_call.1} parent=1 // loop_body
      %s16 = ssub.s32 %s11, 1
      %s17 = ssub.s32 %s11, 2
      %s27 = sadd.s32 1, %s20
      %p28 = scmp.ge.s32.totalorder %s27, 1
      %s29 = scalar_select %p28, 0, %s27
      %s30 = sadd.s32 1, %s19
      %s31 = scalar_select %p28, %s30, %s19
      %p32 = scmp.ge.s32.totalorder %s31, 3
      %s33 = scalar_select %p32, 0, %s31
      %s34 = sadd.s32 1, %s18
      %s35 = scalar_select %p32, %s34, %s18
      %p36 = scmp.ge.s32.totalorder %s35, 2
      %s37 = scalar_select %p36, 0, %s35
      %s39 = sadd.s32 %s38, 1
      %p42 = scmp.eq.s32.totalorder %s11, 5
      %p43 = scmp.ne.s32.totalorder %s38, %s40
      %p44 = scmp.eq.s32.totalorder %s11, 0
      %p45 = por %p43, %p44
      %p46 = scmp.ne.s32.totalorder %s38, %s40
      %p47 = scmp.eq.s32.totalorder %s16, 5
      %p48 = por %p46, %p47
      %p49 = scmp.ne.s32.totalorder %s40, %s41
      %p50 = scmp.eq.s32.totalorder %s16, 0
      %p51 = por %p49, %p50
      %p52 = scmp.ne.s32.totalorder %s40, %s41
      %p53 = scmp.eq.s32.totalorder %s17, 5
      %p54 = por %p52, %p53
      %p56 = scmp.ne.s32.totalorder %s41, %s55
      %p57 = scmp.eq.s32.totalorder %s17, 0
      %p58 = por %p56, %p57
      %s60 = sadd.s32 %s59, 1
      %p63 = scmp.eq.s32.totalorder %s11, 5
      %p64 = scmp.ne.s32.totalorder %s59, %s61
      %p65 = scmp.eq.s32.totalorder %s11, 0
      %p66 = por %p64, %p65
      %p67 = scmp.ne.s32.totalorder %s59, %s61
      %p68 = scmp.eq.s32.totalorder %s16, 5
      %p69 = por %p67, %p68
      %p70 = scmp.ne.s32.totalorder %s61, %s62
      %p71 = scmp.eq.s32.totalorder %s16, 0
      %p72 = por %p70, %p71
      %p73 = scmp.ne.s32.totalorder %s61, %s62
      %p74 = scmp.eq.s32.totalorder %s17, 5
      %p75 = por %p73, %p74
      %p77 = scmp.ne.s32.totalorder %s62, %s76
      %p78 = scmp.eq.s32.totalorder %s17, 0
      %p79 = por %p77, %p78
      %s80 = ssub.s32 %s18, %s37
      %s81 = ssub.s32 %s19, %s33
      %s82 = sor.u32 %s80, %s81
      %s83 = ssub.s32 %s20, %s29
      %s84 = sor.u32 %s82, %s83
      %p85 = scmp.eq.s32.totalorder %s84, 0
      %s87 = sadd.s32 %s86, 1
      %s88 = scalar_select %p85, %s86, %s87
      %p91 = pneg %p85
      %p92 = scmp.eq.s32.totalorder %s11, 5
      %p93 = por %p91, %p92
      %p94 = scmp.ne.s32.totalorder %s86, %s89
      %p95 = scmp.eq.s32.totalorder %s11, 0
      %p96 = por %p94, %p95
      %p97 = scmp.ne.s32.totalorder %s86, %s89
      %p98 = scmp.eq.s32.totalorder %s16, 5
      %p99 = por %p97, %p98
      %p100 = scmp.ne.s32.totalorder %s89, %s90
      %p101 = scmp.eq.s32.totalorder %s16, 0
      %p102 = por %p100, %p101
      %p103 = scmp.ne.s32.totalorder %s89, %s90
      %p104 = scmp.eq.s32.totalorder %s17, 5
      %p105 = por %p103, %p104
      %p107 = scmp.ne.s32.totalorder %s90, %s106
      %p108 = scmp.eq.s32.totalorder %s17, 0
      %p109 = por %p107, %p108
      %s110 = ssub.s32 %s18, %s37
      %s111 = ssub.s32 %s19, %s33
      %s112 = sor.u32 %s110, %s111
      %s113 = ssub.s32 %s20, %s29
      %s114 = sor.u32 %s112, %s113
      %p115 = scmp.eq.s32.totalorder %s114, 0
      %s117 = sadd.s32 %s116, 1
      %s118 = scalar_select %p115, %s116, %s117
      %p121 = pneg %p115
      %p122 = scmp.eq.s32.totalorder %s11, 5
      %p123 = por %p121, %p122
      %p124 = scmp.ne.s32.totalorder %s116, %s119
      %p125 = scmp.eq.s32.totalorder %s11, 0
      %p126 = por %p124, %p125
      %p127 = scmp.ne.s32.totalorder %s116, %s119
      %p128 = scmp.eq.s32.totalorder %s16, 5
      %p129 = por %p127, %p128
      %p130 = scmp.ne.s32.totalorder %s119, %s120
      %p131 = scmp.eq.s32.totalorder %s16, 0
      %p132 = por %p130, %p131
      %p133 = scmp.ne.s32.totalorder %s119, %s120
      %p134 = scmp.eq.s32.totalorder %s17, 5
      %p135 = por %p133, %p134
      %p137 = scmp.ne.s32.totalorder %s120, %s136
      %p138 = scmp.eq.s32.totalorder %s17, 0
      %p139 = por %p137, %p138
      %p140 = scmp.le.s32.totalorder 1, %s11
      %p141 = scmp.lt.s32.totalorder %s11, 7
      %p142 = pnand %p140, %p141
      %p143 = pneg %p142
      // Predicated region
      $region9: #{tpu_custom_call.1} parent=5 // pred_check
        _
      $region10: #{tpu_custom_call.1} parent=5 // pred_check_branch
        %145 = sbr.rel (%p142) target = $region12
      $region11: #{tpu_custom_call.1} parent=5 // pred_region
        %s146 = ssub.s32 %s11, 1
        // Predicated region
        $region13: #{tpu_custom_call.1} parent=11 // pred_check
          %p147 = pneg %p51
        $region14: #{tpu_custom_call.1} parent=11 // pred_check_branch
          %149 = sbr.rel (%p147) target = $region16
        $region15: #{tpu_custom_call.1} parent=11 // pred_region
          %s151 = ssub.s32 16, 16
          %152 = vsyncadd [#allocation3], %s151
          %s154 = sshll.u32 %s0, 4
          %s155 = int_to_ptr.vmem [resolvable:$true] %s154
          %157 = dma.vmem_to_smem %s155, 16, [#allocation2], [#allocation3]
        $region16: #{tpu_custom_call.1} parent=11 // pred_fallthru
          _
        // Predicated region
        $region17: #{tpu_custom_call.1} parent=11 // pred_check
          %p158 = pneg %p72
        $region18: #{tpu_custom_call.1} parent=11 // pred_check_branch
          %160 = sbr.rel (%p158) target = $region20
        $region19: #{tpu_custom_call.1} parent=11 // pred_region
          %s162 = ssub.s32 16, 16
          %163 = vsyncadd [#allocation5], %s162
          %s165 = sshll.u32 %s1, 4
          %s166 = int_to_ptr.vmem [resolvable:$true] %s165
          %168 = dma.vmem_to_smem %s166, 16, [#allocation4], [#allocation5]
        $region20: #{tpu_custom_call.1} parent=11 // pred_fallthru
          _
      $region12: #{tpu_custom_call.1} parent=5 // pred_fallthru
        _
      %p169 = scmp.lt.s32.totalorder %s11, 6
      // Predicated region
      $region21: #{tpu_custom_call.1} parent=5 // pred_check
        %p170 = pneg %p169
      $region22: #{tpu_custom_call.1} parent=5 // pred_check_branch
        %172 = sbr.rel (%p170) target = $region24
      $region23: #{tpu_custom_call.1} parent=5 // pred_region
        // Predicated region
        $region25: #{tpu_custom_call.1} parent=23 // pred_check
          %p173 = pneg %p96
        $region26: #{tpu_custom_call.1} parent=23 // pred_check_branch
          %175 = sbr.rel (%p173) target = $region28
        $region27: #{tpu_custom_call.1} parent=23 // pred_region
          %s176 = smul.u32 3, %s20
          %p177 = scmp.lt.s32.totalorder %s18, 1
          %s178 = scalar_select %p177, %s18, 1
          %p179 = scmp.lt.s32.totalorder %s19, 2
          %s180 = scalar_select %p179, %s19, 2
          %p181 = scmp.lt.s32.totalorder %s176, 2
          %s182 = scalar_select %p181, %s176, 2
          %s183 = smul.addr %s180, 3
          %s184 = sadd.s32 %s182, %s183
          %s185 = smul.addr %s178, 9
          %s186 = sadd.s32 %s184, %s185
          %s187 = smul.addr %s186, 8
          %s188 = scalar_lea.vmem %s2, %s187
          %s189 = smul.u32 3, %s20
        $region28: #{tpu_custom_call.1} parent=23 // pred_fallthru
          _
      $region24: #{tpu_custom_call.1} parent=5 // pred_fallthru
        _
      %p190 = scmp.le.s32.totalorder 1, %s11
      %p191 = scmp.lt.s32.totalorder %s11, 7
      %p192 = pnand %p190, %p191
      %p193 = pneg %p192
      // Predicated region
      $region29: #{tpu_custom_call.1} parent=5 // pred_check
        _
      $region30: #{tpu_custom_call.1} parent=5 // pred_check_branch
        %195 = sbr.rel (%p192) target = $region32
      $region31: #{tpu_custom_call.1} parent=5 // pred_region
        %s196 = ssub.s32 %s11, 1
        // Predicated region
        $region33: #{tpu_custom_call.1} parent=31 // pred_check
          %p197 = pneg %p51
        $region34: #{tpu_custom_call.1} parent=31 // pred_check_branch
          %199 = sbr.rel (%p197) target = $region36
        $region35: #{tpu_custom_call.1} parent=31 // pred_region
          %200 = dma.done [#allocation3], 16
        $region36: #{tpu_custom_call.1} parent=31 // pred_fallthru
          _
        // Predicated region
        $region37: #{tpu_custom_call.1} parent=31 // pred_check
          %p201 = pneg %p72
        $region38: #{tpu_custom_call.1} parent=31 // pred_check_branch
          %203 = sbr.rel (%p201) target = $region40
        $region39: #{tpu_custom_call.1} parent=31 // pred_region
          %204 = dma.done [#allocation5], 16
        $region40: #{tpu_custom_call.1} parent=31 // pred_fallthru
          _
        %205 = sfence
        %p206 = pneg %p51
        %p207 = pneg %p48
        %p208 = pneg %p72
        %p209 = pneg %p69
        %s210 = smul.u32 3, %s23
        %p211 = scmp.lt.s32.totalorder %s21, 1
        %s212 = scalar_select %p211, %s21, 1
        %p213 = scmp.lt.s32.totalorder %s22, 2
        %s214 = scalar_select %p213, %s22, 2
        %p215 = scmp.lt.s32.totalorder %s210, 2
        %s216 = scalar_select %p215, %s210, 2
        %s217 = smul.addr %s214, 3
        %s218 = sadd.s32 %s216, %s217
        %s219 = smul.addr %s212, 9
        %s220 = sadd.s32 %s218, %s219
        %s221 = smul.addr %s220, 8
        %s222 = scalar_lea.vmem %s2, %s221
        %p223 = pneg %p102
        %p224 = pneg %p99
        %p225 = pneg %p132
        %p226 = pneg %p129
        %s227 = smul.u32 3, %s23
        %p228 = scmp.lt.s32.totalorder %s21, 1
        %s229 = scalar_select %p228, %s21, 1
        %p230 = scmp.lt.s32.totalorder %s22, 2
        %s231 = scalar_select %p230, %s22, 2
        %p232 = scmp.lt.s32.totalorder %s227, 2
        %s233 = scalar_select %p232, %s227, 2
        %s234 = smul.addr %s231, 3
        %s235 = sadd.s32 %s233, %s234
        %s236 = smul.addr %s229, 9
        %s237 = sadd.s32 %s235, %s236
        %s238 = smul.addr %s237, 8
        %s239 = scalar_lea.vmem %s3, %s238
        %s240 = smul.u32 3, %s23
        %p241 = scmp.lt.s32.totalorder %s21, 1
        %s242 = scalar_select %p241, %s21, 1
        %p243 = scmp.lt.s32.totalorder %s22, 2
        %s244 = scalar_select %p243, %s22, 2
        %p245 = scmp.lt.s32.totalorder %s240, 2
        %s246 = scalar_select %p245, %s240, 2
        %s247 = smul.addr %s244, 3
        %s248 = sadd.s32 %s246, %s247
        %s249 = smul.addr %s242, 9
        %s250 = sadd.s32 %s248, %s249
        %s251 = smul.addr %s250, 8
        %s252 = scalar_lea.vmem %s2, %s251
        %s253 = smul.u32 3, %s23
        %s254 = smul.u32 3, %s23
        %p255 = scmp.lt.s32.totalorder %s21, 1
        %s256 = scalar_select %p255, %s21, 1
        %p257 = scmp.lt.s32.totalorder %s22, 2
        %s258 = scalar_select %p257, %s22, 2
        %p259 = scmp.lt.s32.totalorder %s254, 2
        %s260 = scalar_select %p259, %s254, 2
        %s261 = smul.addr %s258, 3
        %s262 = sadd.s32 %s260, %s261
        %s263 = smul.addr %s256, 9
        %s264 = sadd.s32 %s262, %s263
        %s265 = smul.addr %s264, 8
        %s266 = scalar_lea.vmem %s3, %s265
        %s267 = smul.u32 3, %s23
        %s268 = sld [smem:[#allocation2 + %s22]]
        %s269 = sld [smem:[#allocation4 + %s22]]
        %v270 = vld [vmem:[%s252] sm:$0xff]
        %v271 = vld [vmem:[%s252 + $0x8] sm:$0xff]
        %v272 = vld [vmem:[%s252 + $0x10] sm:$0xff]
        %v273 = vstv %s268
        %v274 = vmul.f32 %v270, %v273
        %v275 = vmul.f32 %v271, %v273
        %v276 = vmul.f32 %v272, %v273
        %v277 = vstv %s269
        %v278 = vadd.f32 %v274, %v277
        %v279 = vadd.f32 %v275, %v277
        %v280 = vadd.f32 %v276, %v277
        %vm281 = vcmask 130048
        %282 = vst.msk [vmem:[%s266] sm:$0xff] %vm281, %v278
        %283 = vst.msk [vmem:[%s266 + $0x8] sm:$0xff] %vm281, %v279
        %284 = vst.msk [vmem:[%s266 + $0x10] sm:$0xff] %vm281, %v280
        %s285 = smul.u32 3, %s23
        %p286 = scmp.lt.s32.totalorder %s21, 1
        %s287 = scalar_select %p286, %s21, 1
        %p288 = scmp.lt.s32.totalorder %s22, 2
        %s289 = scalar_select %p288, %s22, 2
        %p290 = scmp.lt.s32.totalorder %s285, 2
        %s291 = scalar_select %p290, %s285, 2
        %s292 = smul.addr %s289, 3
        %s293 = sadd.s32 %s291, %s292
        %s294 = smul.addr %s287, 9
        %s295 = sadd.s32 %s293, %s294
        %s296 = smul.addr %s295, 8
        %s297 = scalar_lea.vmem %s3, %s296
        // Predicated region
        $region41: #{tpu_custom_call.1} parent=31 // pred_check
          %p298 = pneg %p129
        $region42: #{tpu_custom_call.1} parent=31 // pred_check_branch
          %300 = sbr.rel (%p298) target = $region44
        $region43: #{tpu_custom_call.1} parent=31 // pred_region
          %s301 = smul.u32 3, %s23
        $region44: #{tpu_custom_call.1} parent=31 // pred_fallthru
          _
      $region32: #{tpu_custom_call.1} parent=5 // pred_fallthru
        _
      %p302 = scmp.le.s32.totalorder 2, %s11
      // Predicated region
      $region45: #{tpu_custom_call.1} parent=5 // pred_check
        %p303 = pneg %p302
      $region46: #{tpu_custom_call.1} parent=5 // pred_check_branch
        %305 = sbr.rel (%p303) target = $region48
      $region47: #{tpu_custom_call.1} parent=5 // pred_region
        %s306 = ssub.s32 %s11, 2
        // Predicated region
        $region49: #{tpu_custom_call.1} parent=47 // pred_check
          %p307 = pneg %p135
        $region50: #{tpu_custom_call.1} parent=47 // pred_check_branch
          %309 = sbr.rel (%p307) target = $region52
        $region51: #{tpu_custom_call.1} parent=47 // pred_region
          %s310 = smul.u32 3, %s26
          %p311 = scmp.lt.s32.totalorder %s24, 1
          %s312 = scalar_select %p311, %s24, 1
          %p313 = scmp.lt.s32.totalorder %s25, 2
          %s314 = scalar_select %p313, %s25, 2
          %p315 = scmp.lt.s32.totalorder %s310, 2
          %s316 = scalar_select %p315, %s310, 2
          %s317 = smul.addr %s314, 3
          %s318 = sadd.s32 %s316, %s317
          %s319 = smul.addr %s312, 9
          %s320 = sadd.s32 %s318, %s319
          %s321 = smul.addr %s320, 8
          %s322 = scalar_lea.vmem %s3, %s321
        $region52: #{tpu_custom_call.1} parent=47 // pred_fallthru
          _
      $region48: #{tpu_custom_call.1} parent=5 // pred_fallthru
        _
    $region6: #{tpu_custom_call.1} parent=1 // loop_footer
      %s15 = sadd.s32 1, %s11
    $region7: #{tpu_custom_call.1} parent=1 // loop_footer_branch
      %10 = sbr.rel target = $region3
    $region8: #{tpu_custom_call.1} parent=1 // loop_exit
      _
    %323 = vsyncpa [#allocation3], 1
    %s324 = scalar_lea.sflag [#allocation3], 1
    %325 = vsyncpa %s324, 1
    %326 = vsyncpa [#allocation5], 1

</llo_original>
